<compile_context>
chip_gen: v6e
topology: v6e:2x2x1
jax: 0.10.0
libtpu: 0.0.40
codegen_flags: <defaults>
</compile_context>

<pallas_src>
import jax
import jax.numpy as jnp
from jax.experimental import pallas as pl
from jax.experimental.pallas import tpu as pltpu


def _round_up(x, m):
    return ((x + m - 1) // m) * m


def mlp_kernel(x_ref, w1_ref, b1_ref, wh_ref, bh_ref, wo_ref, bo_ref, o_ref):
    # encoder: Flatten (done in wrapper) -> Linear(784, H) -> ReLU
    h = jnp.dot(x_ref[...], w1_ref[...], preferred_element_type=jnp.float32)
    h = jnp.maximum(h + b1_ref[...], 0.0)

    # hidden layers: Linear(H, H) -> ReLU (static Python unroll; L is compile-time)
    num_hidden_layers = wh_ref.shape[0]
    for l in range(num_hidden_layers):
        h = jnp.dot(h.astype(jnp.bfloat16), wh_ref[l],
                    preferred_element_type=jnp.float32)
        h = jnp.maximum(h + bh_ref[l], 0.0)

    # decoder: Linear(H, num_classes), output padded to 128 lanes (no LogSoftmax)
    out = jnp.dot(h.astype(jnp.bfloat16), wo_ref[...],
                  preferred_element_type=jnp.float32)
    o_ref[...] = out + bo_ref[...]


def neural_network_forward(x_nchw, params):
    """x_nchw: (B, 1, 28, 28) float32.  Returns logits (B, num_classes) float32."""
    w1, b1, wh, bh, wo, bo = params
    assert wh.shape[0] >= 1, "expects at least one hidden layer (module default is 1)"

    B = x_nchw.shape[0]
    x_flat = x_nchw.reshape(B, -1).astype(jnp.float32)  # nn.Flatten()

    K = x_flat.shape[1]        # 784
    H = w1.shape[1]            # num_hidden_neurons
    C = wo.shape[1]            # num_classes
    L = wh.shape[0]            # num_hidden_layers

    LANE = 128
    K_pad = _round_up(K, LANE)                 # 896
    C_pad = _round_up(C, LANE)                 # 128 (lane-dense output)

    TILE_B_MAX = 256                           # fills 256-wide MXU rows on v6e/v7x
    tile_b = min(TILE_B_MAX, _round_up(B, 8))  # small batches: single tile, no waste
    B_pad = _round_up(B, tile_b)

    # --- wrapper-side padding / dtype prep (zero padding preserves the math) ---
    x_p = jnp.zeros((B_pad, K_pad), jnp.bfloat16).at[:B, :K].set(
        x_flat.astype(jnp.bfloat16))
    w1_p = jnp.zeros((K_pad, H), jnp.bfloat16).at[:K, :].set(w1.astype(jnp.bfloat16))
    wh_b = wh.astype(jnp.bfloat16)                                   # (L, H, H)
    wo_p = jnp.zeros((H, C_pad), jnp.bfloat16).at[:, :C].set(wo.astype(jnp.bfloat16))
    b1_f = b1.astype(jnp.float32)                                    # (1, H)
    bh_f = bh.astype(jnp.float32)                                    # (L, 1, H)
    bo_p = jnp.zeros((1, C_pad), jnp.float32).at[:, :C].set(bo.astype(jnp.float32))

    grid = (B_pad // tile_b,)

    out_padded = pl.pallas_call(
        mlp_kernel,
        out_shape=jax.ShapeDtypeStruct((B_pad, C_pad), jnp.float32),
        grid_spec=pltpu.PrefetchScalarGridSpec(
            num_scalar_prefetch=0,
            grid=grid,
            in_specs=[
                pl.BlockSpec((tile_b, K_pad), lambda i: (i, 0)),      # x: tiled on batch
                pl.BlockSpec((K_pad, H), lambda i: (0, 0)),           # w1: resident
                pl.BlockSpec((1, H), lambda i: (0, 0)),               # b1: resident
                pl.BlockSpec((L, H, H), lambda i: (0, 0, 0)),         # wh: resident
                pl.BlockSpec((L, 1, H), lambda i: (0, 0, 0)),         # bh: resident
                pl.BlockSpec((H, C_pad), lambda i: (0, 0)),           # wo: resident
                pl.BlockSpec((1, C_pad), lambda i: (0, 0)),           # bo: resident
            ],
            out_specs=pl.BlockSpec((tile_b, C_pad), lambda i: (i, 0)),
        ),
        compiler_params=pltpu.CompilerParams(
            dimension_semantics=("parallel",),        # 2x on v7x (2 TCs); no-op elsewhere
            vmem_limit_bytes=32 * 1024 * 1024,        # explicit budget; safe on 64 MiB v7x
        ),
    )(x_p, w1_p, b1_f, wh_b, bh_f, wo_p, bo_p)

    return out_padded[:B, :C]


def init_params(key, num_classes, num_hidden_neurons, num_hidden_layers):
    """Deterministic init mimicking PyTorch nn.Linear uniform(-1/sqrt(fan_in), ...).
    Weights stored as (in, out) — already transposed relative to PyTorch."""
    def linear(k, fan_in, fan_out):
        kw, kb = jax.random.split(k)
        bound = 1.0 / jnp.sqrt(fan_in)
        w = jax.random.uniform(kw, (fan_in, fan_out), jnp.float32, -bound, bound)
        b = jax.random.uniform(kb, (1, fan_out), jnp.float32, -bound, bound)
        return w, b

    keys = jax.random.split(key, num_hidden_layers + 2)
    w1, b1 = linear(keys[0], 28 * 28, num_hidden_neurons)

    wh_list, bh_list = [], []
    for _ in range(num_hidden_layers):
        w, b = linear(keys[1 + len(wh_list)], num_hidden_neurons, num_hidden_neurons)
        wh_list.append(w)
        bh_list.append(b)
    wh = jnp.stack(wh_list, axis=0)                      # (L, H, H)
    bh = jnp.stack(bh_list, axis=0)                      # (L, 1, H)

    wo, bo = linear(keys[-1], num_hidden_neurons, num_classes)
    return (w1, b1, wh, bh, wo, bo)


if __name__ == "__main__":
    batch = 8
    num_classes = 10
    num_hidden_neurons = 128
    num_hidden_layers = 2

    key = jax.random.PRNGKey(0)
    k_x, k_p = jax.random.split(key)

    x = jax.random.normal(k_x, (batch, 1, 28, 28), dtype=jnp.float32)  # NCHW
    params = init_params(k_p, num_classes, num_hidden_neurons, num_hidden_layers)

    fwd = jax.jit(neural_network_forward)
    logits = fwd(x, params)
    jax.block_until_ready(logits)
    assert logits.shape == (batch, num_classes)

    # Numerics check against a pure-JAX reference that applies the SAME bf16 matmul
    # inputs / f32 accumulation as the kernel (so only accumulation-order noise remains).
    w1, b1, wh, bh, wo, bo = params
    def bdot(a, b):
        return jnp.dot(a.astype(jnp.bfloat16), b.astype(jnp.bfloat16),
                       preferred_element_type=jnp.float32)
    xf = x.reshape(batch, -1)
    ref = jnp.maximum(bdot(xf, w1) + b1, 0.0)
    for l in range(num_hidden_layers):
        ref = jnp.maximum(bdot(ref, wh[l]) + bh[l], 0.0)
    ref = bdot(ref, wo) + bo

    max_diff = jnp.max(jnp.abs(logits - ref))
    assert jnp.allclose(logits, ref, atol=2e-2, rtol=2e-2), f"max abs diff {max_diff}"

    print("KERNEL_OK")
</pallas_src>

<mosaic_0001>
module attributes {stable_mosaic.version = 11 : i64} {
  func.func @mlp_kernel(%arg0: i32, %arg1: memref<8x896xbf16, #tpu.memory_space<vmem>>, %arg2: memref<896x128xbf16, #tpu.memory_space<vmem>>, %arg3: memref<1x128xf32, #tpu.memory_space<vmem>>, %arg4: memref<2x128x128xbf16, #tpu.memory_space<vmem>>, %arg5: memref<2x1x128xf32, #tpu.memory_space<vmem>>, %arg6: memref<128x128xbf16, #tpu.memory_space<vmem>>, %arg7: memref<1x128xf32, #tpu.memory_space<vmem>>, %arg8: memref<8x128xf32, #tpu.memory_space<vmem>>) attributes {dimension_semantics = [#tpu.dimension_semantics<parallel>], iteration_bounds = array<i64: 1>, scalar_prefetch = 0 : i64, scratch_operands = 0 : i64, tpu.core_type = #tpu.core_type<tc>, window_params = [{transform_indices = @transform_0, window_bounds = array<i64: 8, 896>}, {pipeline_mode = #tpu.pipeline_mode<synchronous>, transform_indices = @transform_1, window_bounds = array<i64: 896, 128>}, {pipeline_mode = #tpu.pipeline_mode<synchronous>, transform_indices = @transform_2, window_bounds = array<i64: 1, 128>}, {pipeline_mode = #tpu.pipeline_mode<synchronous>, transform_indices = @transform_3, window_bounds = array<i64: 2, 128, 128>}, {pipeline_mode = #tpu.pipeline_mode<synchronous>, transform_indices = @transform_4, window_bounds = array<i64: 2, 1, 128>}, {pipeline_mode = #tpu.pipeline_mode<synchronous>, transform_indices = @transform_5, window_bounds = array<i64: 128, 128>}, {pipeline_mode = #tpu.pipeline_mode<synchronous>, transform_indices = @transform_6, window_bounds = array<i64: 1, 128>}, {transform_indices = @transform_7, window_bounds = array<i64: 8, 128>}]} {
    %c0 = arith.constant 0 : index
    %c0_0 = arith.constant 0 : index
    %0 = vector.load %arg1[%c0, %c0_0] : memref<8x896xbf16, #tpu.memory_space<vmem>>, vector<8x896xbf16>
    %c0_1 = arith.constant 0 : index
    %c0_2 = arith.constant 0 : index
    %1 = vector.load %arg2[%c0_1, %c0_2] : memref<896x128xbf16, #tpu.memory_space<vmem>>, vector<896x128xbf16>
    %cst = arith.constant dense<0.000000e+00> : vector<8x128xf32>
    %2 = tpu.matmul %0, %1, %cst {dimension_numbers = #tpu.dot_dimension_numbers<[1], [0], [0], [1], [0, 0, 1, 1], [], []>} : vector<8x896xbf16>, vector<896x128xbf16>, vector<8x128xf32> -> vector<8x128xf32>
    %c0_3 = arith.constant 0 : index
    %c0_4 = arith.constant 0 : index
    %3 = vector.load %arg3[%c0_3, %c0_4] : memref<1x128xf32, #tpu.memory_space<vmem>>, vector<1x128xf32>
    %4 = vector.broadcast %3 : vector<1x128xf32> to vector<8x128xf32>
    %5 = arith.addf %2, %4 : vector<8x128xf32>
    %cst_5 = arith.constant 0.000000e+00 : f32
    %6 = vector.broadcast %cst_5 : f32 to vector<8x128xf32>
    %7 = arith.maximumf %5, %6 : vector<8x128xf32>
    %8 = arith.truncf %7 : vector<8x128xf32> to vector<8x128xbf16>
    %c0_6 = arith.constant 0 : index
    %c0_7 = arith.constant 0 : index
    %c0_8 = arith.constant 0 : index
    %9 = vector.load %arg4[%c0_6, %c0_7, %c0_8] : memref<2x128x128xbf16, #tpu.memory_space<vmem>>, vector<1x128x128xbf16>
    %10 = vector.shape_cast %9 : vector<1x128x128xbf16> to vector<128x128xbf16>
    %cst_9 = arith.constant dense<0.000000e+00> : vector<8x128xf32>
    %11 = tpu.matmul %8, %10, %cst_9 {dimension_numbers = #tpu.dot_dimension_numbers<[1], [0], [0], [1], [0, 0, 1, 1], [], []>} : vector<8x128xbf16>, vector<128x128xbf16>, vector<8x128xf32> -> vector<8x128xf32>
    %c0_10 = arith.constant 0 : index
    %c0_11 = arith.constant 0 : index
    %c0_12 = arith.constant 0 : index
    %12 = vector.load %arg5[%c0_10, %c0_11, %c0_12] : memref<2x1x128xf32, #tpu.memory_space<vmem>>, vector<1x1x128xf32>
    %13 = vector.shape_cast %12 : vector<1x1x128xf32> to vector<1x128xf32>
    %14 = vector.broadcast %13 : vector<1x128xf32> to vector<8x128xf32>
    %15 = arith.addf %11, %14 : vector<8x128xf32>
    %cst_13 = arith.constant 0.000000e+00 : f32
    %16 = vector.broadcast %cst_13 : f32 to vector<8x128xf32>
    %17 = arith.maximumf %15, %16 : vector<8x128xf32>
    %18 = arith.truncf %17 : vector<8x128xf32> to vector<8x128xbf16>
    %c1 = arith.constant 1 : index
    %c0_14 = arith.constant 0 : index
    %c0_15 = arith.constant 0 : index
    %19 = vector.load %arg4[%c1, %c0_14, %c0_15] : memref<2x128x128xbf16, #tpu.memory_space<vmem>>, vector<1x128x128xbf16>
    %20 = vector.shape_cast %19 : vector<1x128x128xbf16> to vector<128x128xbf16>
    %cst_16 = arith.constant dense<0.000000e+00> : vector<8x128xf32>
    %21 = tpu.matmul %18, %20, %cst_16 {dimension_numbers = #tpu.dot_dimension_numbers<[1], [0], [0], [1], [0, 0, 1, 1], [], []>} : vector<8x128xbf16>, vector<128x128xbf16>, vector<8x128xf32> -> vector<8x128xf32>
    %c1_17 = arith.constant 1 : index
    %c0_18 = arith.constant 0 : index
    %c0_19 = arith.constant 0 : index
    %22 = vector.load %arg5[%c1_17, %c0_18, %c0_19] : memref<2x1x128xf32, #tpu.memory_space<vmem>>, vector<1x1x128xf32>
    %23 = vector.shape_cast %22 : vector<1x1x128xf32> to vector<1x128xf32>
    %24 = vector.broadcast %23 : vector<1x128xf32> to vector<8x128xf32>
    %25 = arith.addf %21, %24 : vector<8x128xf32>
    %cst_20 = arith.constant 0.000000e+00 : f32
    %26 = vector.broadcast %cst_20 : f32 to vector<8x128xf32>
    %27 = arith.maximumf %25, %26 : vector<8x128xf32>
    %28 = arith.truncf %27 : vector<8x128xf32> to vector<8x128xbf16>
    %c0_21 = arith.constant 0 : index
    %c0_22 = arith.constant 0 : index
    %29 = vector.load %arg6[%c0_21, %c0_22] : memref<128x128xbf16, #tpu.memory_space<vmem>>, vector<128x128xbf16>
    %cst_23 = arith.constant dense<0.000000e+00> : vector<8x128xf32>
    %30 = tpu.matmul %28, %29, %cst_23 {dimension_numbers = #tpu.dot_dimension_numbers<[1], [0], [0], [1], [0, 0, 1, 1], [], []>} : vector<8x128xbf16>, vector<128x128xbf16>, vector<8x128xf32> -> vector<8x128xf32>
    %c0_24 = arith.constant 0 : index
    %c0_25 = arith.constant 0 : index
    %31 = vector.load %arg7[%c0_24, %c0_25] : memref<1x128xf32, #tpu.memory_space<vmem>>, vector<1x128xf32>
    %32 = vector.broadcast %31 : vector<1x128xf32> to vector<8x128xf32>
    %33 = arith.addf %30, %32 : vector<8x128xf32>
    %c0_26 = arith.constant 0 : index
    %c0_27 = arith.constant 0 : index
    %34 = vector.load %arg8[%c0_26, %c0_27] : memref<8x128xf32, #tpu.memory_space<vmem>>, vector<8x128xf32>
    tpu.vector_store %arg8[%c0_26, %c0_27], %33 {strides = array<i32>} : memref<8x128xf32, #tpu.memory_space<vmem>>, vector<8x128xf32>,
    return
  }
  func.func @transform_0(%arg0: i32) -> (i32, i32) {
    %c0_i32 = arith.constant 0 : i32
    %c0_i32_0 = arith.constant 0 : i32
    return %arg0, %c0_i32 : i32, i32
  }
  func.func @transform_1(%arg0: i32) -> (i32, i32) {
    %c0_i32 = arith.constant 0 : i32
    %c0_i32_0 = arith.constant 0 : i32
    %c0_i32_1 = arith.constant 0 : i32
    return %c0_i32, %c0_i32_0 : i32, i32
  }
  func.func @transform_2(%arg0: i32) -> (i32, i32) {
    %c0_i32 = arith.constant 0 : i32
    %c0_i32_0 = arith.constant 0 : i32
    %c0_i32_1 = arith.constant 0 : i32
    return %c0_i32, %c0_i32_0 : i32, i32
  }
  func.func @transform_3(%arg0: i32) -> (i32, i32, i32) {
    %c0_i32 = arith.constant 0 : i32
    %c0_i32_0 = arith.constant 0 : i32
    %c0_i32_1 = arith.constant 0 : i32
    %c0_i32_2 = arith.constant 0 : i32
    return %c0_i32, %c0_i32_0, %c0_i32_1 : i32, i32, i32
  }
  func.func @transform_4(%arg0: i32) -> (i32, i32, i32) {
    %c0_i32 = arith.constant 0 : i32
    %c0_i32_0 = arith.constant 0 : i32
    %c0_i32_1 = arith.constant 0 : i32
    %c0_i32_2 = arith.constant 0 : i32
    return %c0_i32, %c0_i32_0, %c0_i32_1 : i32, i32, i32
  }
  func.func @transform_5(%arg0: i32) -> (i32, i32) {
    %c0_i32 = arith.constant 0 : i32
    %c0_i32_0 = arith.constant 0 : i32
    %c0_i32_1 = arith.constant 0 : i32
    return %c0_i32, %c0_i32_0 : i32, i32
  }
  func.func @transform_6(%arg0: i32) -> (i32, i32) {
    %c0_i32 = arith.constant 0 : i32
    %c0_i32_0 = arith.constant 0 : i32
    %c0_i32_1 = arith.constant 0 : i32
    return %c0_i32, %c0_i32_0 : i32, i32
  }
  func.func @transform_7(%arg0: i32) -> (i32, i32) {
    %c0_i32 = arith.constant 0 : i32
    %c0_i32_0 = arith.constant 0 : i32
    return %arg0, %c0_i32 : i32, i32
  }
}

</mosaic_0001>

<llo_original>
// kernel: neural_network_forward.1
$region0: #{neural_network_forward.1}
  #allocation0 [shape = 'u32[]', space=smem, size = 0x4, offset = 0x4, fixed_abs, tag = 'smem constant byte address 0x4 - core index']
  #allocation1 [shape = 'u32[144,128]{1,0:T(1,128)}', space=vmem, size = 0x12000, scoped, tag = 'internal scratch']
  %s0 = inlined_call_operand.vmem [shape: bf16[8,896], index: 0, kind: input, shape index: {}]
  %s1 = inlined_call_operand.vmem [shape: bf16[896,128], index: 1, kind: input, shape index: {}]
  %s2 = inlined_call_operand.vmem [shape: f32[1,128], index: 2, kind: input, shape index: {}]
  %s3 = inlined_call_operand.vmem [shape: bf16[2,128,128], index: 3, kind: input, shape index: {}]
  %s4 = inlined_call_operand.vmem [shape: f32[2,1,128], index: 4, kind: input, shape index: {}]
  %s5 = inlined_call_operand.vmem [shape: bf16[128,128], index: 5, kind: input, shape index: {}]
  %s6 = inlined_call_operand.vmem [shape: f32[1,128], index: 6, kind: input, shape index: {}]
  %s7 = inlined_call_operand.hbm [shape: f32[8,128], index: 7, kind: output, shape index: {}]
  %s8 = sld [smem:[#allocation0]]
  $region38: #{neural_network_forward.1} parent=0
    _
  %s10 = ssub.s32 1, %s8
  %s11 = scalar_select 0, %s10, %s8
  $region1: #{neural_network_forward.1} parent=0
    #allocation2 [shape = 'u8[4096]{0}', space=vmem, size = 0x1000, scoped, tag = 'output window, operand 0, single buffered']
    #allocation3 [shape = 's32[1]{0}', space=sflag, size = 0x4, scoped, tag = 'scoped memory for neural_network_forward.1']
    %12 = vsyncpa [#allocation3], 0
    // Predicated region
    $region2: #{neural_network_forward.1} parent=1 // pred_check
      _
    $region3: #{neural_network_forward.1} parent=1 // pred_check_branch
      %14 = sbr.rel (0) target = $region5
    $region4: #{neural_network_forward.1} parent=1 // pred_region
      _
    $region5: #{neural_network_forward.1} parent=1 // pred_fallthru
      _
    // Predicated region
    $region6: #{neural_network_forward.1} parent=1 // pred_check
      _
    $region7: #{neural_network_forward.1} parent=1 // pred_check_branch
      %16 = sbr.rel (0) target = $region9
    $region8: #{neural_network_forward.1} parent=1 // pred_region
      _
    $region9: #{neural_network_forward.1} parent=1 // pred_fallthru
      _
    // Predicated region
    $region10: #{neural_network_forward.1} parent=1 // pred_check
      _
    $region11: #{neural_network_forward.1} parent=1 // pred_check_branch
      %18 = sbr.rel (0) target = $region13
    $region12: #{neural_network_forward.1} parent=1 // pred_region
      _
    $region13: #{neural_network_forward.1} parent=1 // pred_fallthru
      _
    // Predicated region
    $region14: #{neural_network_forward.1} parent=1 // pred_check
      _
    $region15: #{neural_network_forward.1} parent=1 // pred_check_branch
      %20 = sbr.rel (0) target = $region17
    $region16: #{neural_network_forward.1} parent=1 // pred_region
      _
    $region17: #{neural_network_forward.1} parent=1 // pred_fallthru
      _
    // Predicated region
    $region18: #{neural_network_forward.1} parent=1 // pred_check
      _
    $region19: #{neural_network_forward.1} parent=1 // pred_check_branch
      %22 = sbr.rel (0) target = $region21
    $region20: #{neural_network_forward.1} parent=1 // pred_region
      _
    $region21: #{neural_network_forward.1} parent=1 // pred_fallthru
      _
    // Predicated region
    $region22: #{neural_network_forward.1} parent=1 // pred_check
      _
    $region23: #{neural_network_forward.1} parent=1 // pred_check_branch
      %24 = sbr.rel (0) target = $region25
    $region24: #{neural_network_forward.1} parent=1 // pred_region
      _
    $region25: #{neural_network_forward.1} parent=1 // pred_fallthru
      _
    // Predicated region
    $region26: #{neural_network_forward.1} parent=1 // pred_check
      _
    $region27: #{neural_network_forward.1} parent=1 // pred_check_branch
      %26 = sbr.rel (0) target = $region29
    $region28: #{neural_network_forward.1} parent=1 // pred_region
      _
    $region29: #{neural_network_forward.1} parent=1 // pred_fallthru
      _
    %v28 = vld [vmem:[%s0] sm:$0xff]
    %v29 = vld [vmem:[%s0 + $0x8] sm:$0xff]
    %v30 = vld [vmem:[%s0 + $0x10] sm:$0xff]
    %v31 = vld [vmem:[%s0 + $0x18] sm:$0xf]
    %v32 = vld [vmem:[%s1] sm:$0xf]
    %v33 = vld [vmem:[%s1 + $0x4] sm:$0xf]
    %v34 = vld [vmem:[%s1 + $0x8] sm:$0xf]
    %v35 = vld [vmem:[%s1 + $0xc] sm:$0xf]
    %v36 = vld [vmem:[%s1 + $0x10] sm:$0xf]
    %v37 = vld [vmem:[%s1 + $0x14] sm:$0xf]
    %v38 = vld [vmem:[%s1 + $0x18] sm:$0xf]
    %v39 = vld [vmem:[%s1 + $0x1c] sm:$0xf]
    %v40 = vld [vmem:[%s1 + $0x20] sm:$0xf]
    %v41 = vld [vmem:[%s1 + $0x24] sm:$0xf]
    %v42 = vld [vmem:[%s1 + $0x28] sm:$0xf]
    %v43 = vld [vmem:[%s1 + $0x2c] sm:$0xf]
    %v44 = vld [vmem:[%s1 + $0x30] sm:$0xf]
    %v45 = vld [vmem:[%s1 + $0x34] sm:$0xf]
    %v46 = vld [vmem:[%s1 + $0x38] sm:$0xf]
    %v47 = vld [vmem:[%s1 + $0x3c] sm:$0xf]
    %v48 = vld [vmem:[%s1 + $0x40] sm:$0xf]
    %v49 = vld [vmem:[%s1 + $0x44] sm:$0xf]
    %v50 = vld [vmem:[%s1 + $0x48] sm:$0xf]
    %v51 = vld [vmem:[%s1 + $0x4c] sm:$0xf]
    %v52 = vld [vmem:[%s1 + $0x50] sm:$0xf]
    %v53 = vld [vmem:[%s1 + $0x54] sm:$0xf]
    %v54 = vld [vmem:[%s1 + $0x58] sm:$0xf]
    %v55 = vld [vmem:[%s1 + $0x5c] sm:$0xf]
    %v56 = vld [vmem:[%s1 + $0x60] sm:$0xf]
    %v57 = vld [vmem:[%s1 + $0x64] sm:$0xf]
    %v58 = vld [vmem:[%s1 + $0x68] sm:$0xf]
    %v59 = vld [vmem:[%s1 + $0x6c] sm:$0xf]
    %v60 = vld [vmem:[%s1 + $0x70] sm:$0xf]
    %v61 = vld [vmem:[%s1 + $0x74] sm:$0xf]
    %v62 = vld [vmem:[%s1 + $0x78] sm:$0xf]
    %v63 = vld [vmem:[%s1 + $0x7c] sm:$0xf]
    %v64 = vld [vmem:[%s1 + $0x80] sm:$0xf]
    %v65 = vld [vmem:[%s1 + $0x84] sm:$0xf]
    %v66 = vld [vmem:[%s1 + $0x88] sm:$0xf]
    %v67 = vld [vmem:[%s1 + $0x8c] sm:$0xf]
    %v68 = vld [vmem:[%s1 + $0x90] sm:$0xf]
    %v69 = vld [vmem:[%s1 + $0x94] sm:$0xf]
    %v70 = vld [vmem:[%s1 + $0x98] sm:$0xf]
    %v71 = vld [vmem:[%s1 + $0x9c] sm:$0xf]
    %v72 = vld [vmem:[%s1 + $0xa0] sm:$0xf]
    %v73 = vld [vmem:[%s1 + $0xa4] sm:$0xf]
    %v74 = vld [vmem:[%s1 + $0xa8] sm:$0xf]
    %v75 = vld [vmem:[%s1 + $0xac] sm:$0xf]
    %v76 = vld [vmem:[%s1 + $0xb0] sm:$0xf]
    %v77 = vld [vmem:[%s1 + $0xb4] sm:$0xf]
    %v78 = vld [vmem:[%s1 + $0xb8] sm:$0xf]
    %v79 = vld [vmem:[%s1 + $0xbc] sm:$0xf]
    %v80 = vld [vmem:[%s1 + $0xc0] sm:$0xf]
    %v81 = vld [vmem:[%s1 + $0xc4] sm:$0xf]
    %v82 = vld [vmem:[%s1 + $0xc8] sm:$0xf]
    %v83 = vld [vmem:[%s1 + $0xcc] sm:$0xf]
    %v84 = vld [vmem:[%s1 + $0xd0] sm:$0xf]
    %v85 = vld [vmem:[%s1 + $0xd4] sm:$0xf]
    %v86 = vld [vmem:[%s1 + $0xd8] sm:$0xf]
    %v87 = vld [vmem:[%s1 + $0xdc] sm:$0xf]
    %v88 = vld [vmem:[%s1 + $0xe0] sm:$0xf]
    %v89 = vld [vmem:[%s1 + $0xe4] sm:$0xf]
    %v90 = vld [vmem:[%s1 + $0xe8] sm:$0xf]
    %v91 = vld [vmem:[%s1 + $0xec] sm:$0xf]
    %v92 = vld [vmem:[%s1 + $0xf0] sm:$0xf]
    %v93 = vld [vmem:[%s1 + $0xf4] sm:$0xf]
    %v94 = vld [vmem:[%s1 + $0xf8] sm:$0xf]
    %v95 = vld [vmem:[%s1 + $0xfc] sm:$0xf]
    %v96 = vld [vmem:[%s1 + $0x100] sm:$0xf]
    %v97 = vld [vmem:[%s1 + $0x104] sm:$0xf]
    %v98 = vld [vmem:[%s1 + $0x108] sm:$0xf]
    %v99 = vld [vmem:[%s1 + $0x10c] sm:$0xf]
    %v100 = vld [vmem:[%s1 + $0x110] sm:$0xf]
    %v101 = vld [vmem:[%s1 + $0x114] sm:$0xf]
    %v102 = vld [vmem:[%s1 + $0x118] sm:$0xf]
    %v103 = vld [vmem:[%s1 + $0x11c] sm:$0xf]
    %v104 = vld [vmem:[%s1 + $0x120] sm:$0xf]
    %v105 = vld [vmem:[%s1 + $0x124] sm:$0xf]
    %v106 = vld [vmem:[%s1 + $0x128] sm:$0xf]
    %v107 = vld [vmem:[%s1 + $0x12c] sm:$0xf]
    %v108 = vld [vmem:[%s1 + $0x130] sm:$0xf]
    %v109 = vld [vmem:[%s1 + $0x134] sm:$0xf]
    %v110 = vld [vmem:[%s1 + $0x138] sm:$0xf]
    %v111 = vld [vmem:[%s1 + $0x13c] sm:$0xf]
    %v112 = vld [vmem:[%s1 + $0x140] sm:$0xf]
    %v113 = vld [vmem:[%s1 + $0x144] sm:$0xf]
    %v114 = vld [vmem:[%s1 + $0x148] sm:$0xf]
    %v115 = vld [vmem:[%s1 + $0x14c] sm:$0xf]
    %v116 = vld [vmem:[%s1 + $0x150] sm:$0xf]
    %v117 = vld [vmem:[%s1 + $0x154] sm:$0xf]
    %v118 = vld [vmem:[%s1 + $0x158] sm:$0xf]
    %v119 = vld [vmem:[%s1 + $0x15c] sm:$0xf]
    %v120 = vld [vmem:[%s1 + $0x160] sm:$0xf]
    %v121 = vld [vmem:[%s1 + $0x164] sm:$0xf]
    %v122 = vld [vmem:[%s1 + $0x168] sm:$0xf]
    %v123 = vld [vmem:[%s1 + $0x16c] sm:$0xf]
    %v124 = vld [vmem:[%s1 + $0x170] sm:$0xf]
    %v125 = vld [vmem:[%s1 + $0x174] sm:$0xf]
    %v126 = vld [vmem:[%s1 + $0x178] sm:$0xf]
    %v127 = vld [vmem:[%s1 + $0x17c] sm:$0xf]
    %v128 = vld [vmem:[%s1 + $0x180] sm:$0xf]
    %v129 = vld [vmem:[%s1 + $0x184] sm:$0xf]
    %v130 = vld [vmem:[%s1 + $0x188] sm:$0xf]
    %v131 = vld [vmem:[%s1 + $0x18c] sm:$0xf]
    %v132 = vld [vmem:[%s1 + $0x190] sm:$0xf]
    %v133 = vld [vmem:[%s1 + $0x194] sm:$0xf]
    %v134 = vld [vmem:[%s1 + $0x198] sm:$0xf]
    %v135 = vld [vmem:[%s1 + $0x19c] sm:$0xf]
    %v136 = vld [vmem:[%s1 + $0x1a0] sm:$0xf]
    %v137 = vld [vmem:[%s1 + $0x1a4] sm:$0xf]
    %v138 = vld [vmem:[%s1 + $0x1a8] sm:$0xf]
    %v139 = vld [vmem:[%s1 + $0x1ac] sm:$0xf]
    %v140 = vld [vmem:[%s1 + $0x1b0] sm:$0xf]
    %v141 = vld [vmem:[%s1 + $0x1b4] sm:$0xf]
    %v142 = vld [vmem:[%s1 + $0x1b8] sm:$0xf]
    %v143 = vld [vmem:[%s1 + $0x1bc] sm:$0xf]
    %v144 = vld [vmem:[%s2] sm:$0x1]
    %v146 = vlaneseq
    %v147 = vshrl.u32 %v146, 7
    %v148 = vsub.s32 0, %v147
    %v149 = vrot.slane %v144, %v148
    %v155 = vunpack.c.l.b16 %v28
    %v156 = vunpack.c.h.b16 %v28
    %v157 = vunpack.c.l.b16 %v29
    %v158 = vunpack.c.h.b16 %v29
    %v159 = vunpack.c.l.b16 %v30
    %v160 = vunpack.c.h.b16 %v30
    %v161 = vunpack.c.l.b16 %v31
    %v162 = vpack.c.b16 %v155, %v155
    %v163 = vpack.c.b16 %v156, %v156
    %v164 = vpack.c.b16 %v157, %v157
    %v165 = vpack.c.b16 %v158, %v158
    %v166 = vpack.c.b16 %v159, %v159
    %v167 = vpack.c.b16 %v160, %v160
    %v168 = vpack.c.b16 %v161, %v161
    %v288 = vunpack.c.l.b16 %v32
    %v289 = vunpack.c.l.b16 %v33
    %v290 = vunpack.c.l.b16 %v34
    %v291 = vunpack.c.l.b16 %v35
    %v292 = vunpack.c.l.b16 %v36
    %v293 = vunpack.c.l.b16 %v37
    %v294 = vunpack.c.l.b16 %v38
    %v295 = vunpack.c.l.b16 %v39
    %v296 = vunpack.c.l.b16 %v40
    %v297 = vunpack.c.l.b16 %v41
    %v298 = vunpack.c.l.b16 %v42
    %v299 = vunpack.c.l.b16 %v43
    %v300 = vunpack.c.l.b16 %v44
    %v301 = vunpack.c.l.b16 %v45
    %v302 = vunpack.c.l.b16 %v46
    %v303 = vunpack.c.l.b16 %v47
    %v304 = vunpack.c.l.b16 %v48
    %v305 = vunpack.c.l.b16 %v49
    %v306 = vunpack.c.l.b16 %v50
    %v307 = vunpack.c.l.b16 %v51
    %v308 = vunpack.c.l.b16 %v52
    %v309 = vunpack.c.l.b16 %v53
    %v310 = vunpack.c.l.b16 %v54
    %v311 = vunpack.c.l.b16 %v55
    %v312 = vunpack.c.l.b16 %v56
    %v313 = vunpack.c.l.b16 %v57
    %v314 = vunpack.c.l.b16 %v58
    %v315 = vunpack.c.l.b16 %v59
    %v316 = vunpack.c.l.b16 %v60
    %v317 = vunpack.c.l.b16 %v61
    %v318 = vunpack.c.l.b16 %v62
    %v319 = vunpack.c.l.b16 %v63
    %v320 = vunpack.c.l.b16 %v64
    %v321 = vunpack.c.l.b16 %v65
    %v322 = vunpack.c.l.b16 %v66
    %v323 = vunpack.c.l.b16 %v67
    %v324 = vunpack.c.l.b16 %v68
    %v325 = vunpack.c.l.b16 %v69
    %v326 = vunpack.c.l.b16 %v70
    %v327 = vunpack.c.l.b16 %v71
    %v328 = vunpack.c.l.b16 %v72
    %v329 = vunpack.c.l.b16 %v73
    %v330 = vunpack.c.l.b16 %v74
    %v331 = vunpack.c.l.b16 %v75
    %v332 = vunpack.c.l.b16 %v76
    %v333 = vunpack.c.l.b16 %v77
    %v334 = vunpack.c.l.b16 %v78
    %v335 = vunpack.c.l.b16 %v79
    %v336 = vunpack.c.l.b16 %v80
    %v337 = vunpack.c.l.b16 %v81
    %v338 = vunpack.c.l.b16 %v82
    %v339 = vunpack.c.l.b16 %v83
    %v340 = vunpack.c.l.b16 %v84
    %v341 = vunpack.c.l.b16 %v85
    %v342 = vunpack.c.l.b16 %v86
    %v343 = vunpack.c.l.b16 %v87
    %v344 = vunpack.c.l.b16 %v88
    %v345 = vunpack.c.l.b16 %v89
    %v346 = vunpack.c.l.b16 %v90
    %v347 = vunpack.c.l.b16 %v91
    %v348 = vunpack.c.l.b16 %v92
    %v349 = vunpack.c.l.b16 %v93
    %v350 = vunpack.c.l.b16 %v94
    %v351 = vunpack.c.l.b16 %v95
    %v352 = vunpack.c.l.b16 %v96
    %v353 = vunpack.c.l.b16 %v97
    %v354 = vunpack.c.l.b16 %v98
    %v355 = vunpack.c.l.b16 %v99
    %v356 = vunpack.c.l.b16 %v100
    %v357 = vunpack.c.l.b16 %v101
    %v358 = vunpack.c.l.b16 %v102
    %v359 = vunpack.c.l.b16 %v103
    %v360 = vunpack.c.l.b16 %v104
    %v361 = vunpack.c.l.b16 %v105
    %v362 = vunpack.c.l.b16 %v106
    %v363 = vunpack.c.l.b16 %v107
    %v364 = vunpack.c.l.b16 %v108
    %v365 = vunpack.c.l.b16 %v109
    %v366 = vunpack.c.l.b16 %v110
    %v367 = vunpack.c.l.b16 %v111
    %v368 = vunpack.c.l.b16 %v112
    %v369 = vunpack.c.l.b16 %v113
    %v370 = vunpack.c.l.b16 %v114
    %v371 = vunpack.c.l.b16 %v115
    %v372 = vunpack.c.l.b16 %v116
    %v373 = vunpack.c.l.b16 %v117
    %v374 = vunpack.c.l.b16 %v118
    %v375 = vunpack.c.l.b16 %v119
    %v376 = vunpack.c.l.b16 %v120
    %v377 = vunpack.c.l.b16 %v121
    %v378 = vunpack.c.l.b16 %v122
    %v379 = vunpack.c.l.b16 %v123
    %v380 = vunpack.c.l.b16 %v124
    %v381 = vunpack.c.l.b16 %v125
    %v382 = vunpack.c.l.b16 %v126
    %v383 = vunpack.c.l.b16 %v127
    %v384 = vunpack.c.l.b16 %v128
    %v385 = vunpack.c.l.b16 %v129
    %v386 = vunpack.c.l.b16 %v130
    %v387 = vunpack.c.l.b16 %v131
    %v388 = vunpack.c.l.b16 %v132
    %v389 = vunpack.c.l.b16 %v133
    %v390 = vunpack.c.l.b16 %v134
    %v391 = vunpack.c.l.b16 %v135
    %v392 = vunpack.c.l.b16 %v136
    %v393 = vunpack.c.l.b16 %v137
    %v394 = vunpack.c.l.b16 %v138
    %v395 = vunpack.c.l.b16 %v139
    %v396 = vunpack.c.l.b16 %v140
    %v397 = vunpack.c.l.b16 %v141
    %v398 = vunpack.c.l.b16 %v142
    %v399 = vunpack.c.l.b16 %v143
    %v400 = vpack.c.b16 %v289, %v288
    %v401 = vpack.c.b16 %v291, %v290
    %v402 = vpack.c.b16 %v293, %v292
    %v403 = vpack.c.b16 %v295, %v294
    %v404 = vpack.c.b16 %v297, %v296
    %v405 = vpack.c.b16 %v299, %v298
    %v406 = vpack.c.b16 %v301, %v300
    %v407 = vpack.c.b16 %v303, %v302
    %v408 = vpack.c.b16 %v305, %v304
    %v409 = vpack.c.b16 %v307, %v306
    %v410 = vpack.c.b16 %v309, %v308
    %v411 = vpack.c.b16 %v311, %v310
    %v412 = vpack.c.b16 %v313, %v312
    %v413 = vpack.c.b16 %v315, %v314
    %v414 = vpack.c.b16 %v317, %v316
    %v415 = vpack.c.b16 %v319, %v318
    %v416 = vpack.c.b16 %v321, %v320
    %v417 = vpack.c.b16 %v323, %v322
    %v418 = vpack.c.b16 %v325, %v324
    %v419 = vpack.c.b16 %v327, %v326
    %v420 = vpack.c.b16 %v329, %v328
    %v421 = vpack.c.b16 %v331, %v330
    %v422 = vpack.c.b16 %v333, %v332
    %v423 = vpack.c.b16 %v335, %v334
    %v424 = vpack.c.b16 %v337, %v336
    %v425 = vpack.c.b16 %v339, %v338
    %v426 = vpack.c.b16 %v341, %v340
    %v427 = vpack.c.b16 %v343, %v342
    %v428 = vpack.c.b16 %v345, %v344
    %v429 = vpack.c.b16 %v347, %v346
    %v430 = vpack.c.b16 %v349, %v348
    %v431 = vpack.c.b16 %v351, %v350
    %v432 = vpack.c.b16 %v353, %v352
    %v433 = vpack.c.b16 %v355, %v354
    %v434 = vpack.c.b16 %v357, %v356
    %v435 = vpack.c.b16 %v359, %v358
    %v436 = vpack.c.b16 %v361, %v360
    %v437 = vpack.c.b16 %v363, %v362
    %v438 = vpack.c.b16 %v365, %v364
    %v439 = vpack.c.b16 %v367, %v366
    %v440 = vpack.c.b16 %v369, %v368
    %v441 = vpack.c.b16 %v371, %v370
    %v442 = vpack.c.b16 %v373, %v372
    %v443 = vpack.c.b16 %v375, %v374
    %v444 = vpack.c.b16 %v377, %v376
    %v445 = vpack.c.b16 %v379, %v378
    %v446 = vpack.c.b16 %v381, %v380
    %v447 = vpack.c.b16 %v383, %v382
    %v448 = vpack.c.b16 %v385, %v384
    %v449 = vpack.c.b16 %v387, %v386
    %v450 = vpack.c.b16 %v389, %v388
    %v451 = vpack.c.b16 %v391, %v390
    %v452 = vpack.c.b16 %v393, %v392
    %v453 = vpack.c.b16 %v395, %v394
    %v454 = vpack.c.b16 %v397, %v396
    %v455 = vpack.c.b16 %v399, %v398
    %512 = vmatprep.subr.bf16.mxu0 0
    %513 = vmatpush1.bf16.msra.mxu0 %v407
    %514 = vmatprep.subr.bf16.mxu0 0
    %515 = vmatpush1.bf16.msra.mxu0 %v406
    %516 = vmatprep.subr.bf16.mxu0 0
    %517 = vmatpush1.bf16.msra.mxu0 %v405
    %518 = vmatprep.subr.bf16.mxu0 0
    %519 = vmatpush1.bf16.msra.mxu0 %v404
    %520 = vmatprep.subr.bf16.mxu0 0
    %521 = vmatpush1.bf16.msra.mxu0 %v403
    %522 = vmatprep.subr.bf16.mxu0 0
    %523 = vmatpush1.bf16.msra.mxu0 %v402
    %524 = vmatprep.subr.bf16.mxu0 0
    %525 = vmatpush1.bf16.msra.mxu0 %v401
    %526 = vmatprep.subr.bf16.mxu0 0
    %527 = vmatpush1.bf16.msra.mxu0 %v400
    %528 = vmatprep.subr.bf16.mxu0 0
    %529 = vmatpush2.bf16.msra.mxu0 %v415
    %530 = vmatprep.subr.bf16.mxu0 0
    %531 = vmatpush2.bf16.msra.mxu0 %v414
    %532 = vmatprep.subr.bf16.mxu0 0
    %533 = vmatpush2.bf16.msra.mxu0 %v413
    %534 = vmatprep.subr.bf16.mxu0 0
    %535 = vmatpush2.bf16.msra.mxu0 %v412
    %536 = vmatprep.subr.bf16.mxu0 0
    %537 = vmatpush2.bf16.msra.mxu0 %v411
    %538 = vmatprep.subr.bf16.mxu0 0
    %539 = vmatpush2.bf16.msra.mxu0 %v410
    %540 = vmatprep.subr.bf16.mxu0 0
    %541 = vmatpush2.bf16.msra.mxu0 %v409
    %542 = vmatprep.subr.bf16.mxu0 0
    %543 = vmatpush2.bf16.msra.mxu0 %v408
    %544 = vmatprep.mubr.bf16.mxu0 %v163
    %545 = vmatmul.mubr.bf16.gmra.mxu0 %v162
    %v546 = vpop.f32.mrf.mxu0
    %v547 = vadd.f32 %v149, %v546
    %v548 = vpop.f32.mrf.mxu0
    %v549 = vpop.f32.mrf.mxu0
    %v550 = vpop.f32.mrf.mxu0
    %551 = vdwg.mxu0
    %552 = vmatprep.subr.bf16.mxu0 0
    %553 = vmatpush1.bf16.msra.mxu0 %v423
    %554 = vmatprep.subr.bf16.mxu0 0
    %555 = vmatpush1.bf16.msra.mxu0 %v422
    %556 = vmatprep.subr.bf16.mxu0 0
    %557 = vmatpush1.bf16.msra.mxu0 %v421
    %558 = vmatprep.subr.bf16.mxu0 0
    %559 = vmatpush1.bf16.msra.mxu0 %v420
    %560 = vmatprep.subr.bf16.mxu0 0
    %561 = vmatpush1.bf16.msra.mxu0 %v419
    %562 = vmatprep.subr.bf16.mxu0 0
    %563 = vmatpush1.bf16.msra.mxu0 %v418
    %564 = vmatprep.subr.bf16.mxu0 0
    %565 = vmatpush1.bf16.msra.mxu0 %v417
    %566 = vmatprep.subr.bf16.mxu0 0
    %567 = vmatpush1.bf16.msra.mxu0 %v416
    %568 = vmatprep.subr.bf16.mxu0 0
    %569 = vmatpush2.bf16.msra.mxu0 %v431
    %570 = vmatprep.subr.bf16.mxu0 0
    %571 = vmatpush2.bf16.msra.mxu0 %v430
    %572 = vmatprep.subr.bf16.mxu0 0
    %573 = vmatpush2.bf16.msra.mxu0 %v429
    %574 = vmatprep.subr.bf16.mxu0 0
    %575 = vmatpush2.bf16.msra.mxu0 %v428
    %576 = vmatprep.subr.bf16.mxu0 0
    %577 = vmatpush2.bf16.msra.mxu0 %v427
    %578 = vmatprep.subr.bf16.mxu0 0
    %579 = vmatpush2.bf16.msra.mxu0 %v426
    %580 = vmatprep.subr.bf16.mxu0 0
    %581 = vmatpush2.bf16.msra.mxu0 %v425
    %582 = vmatprep.subr.bf16.mxu0 0
    %583 = vmatpush2.bf16.msra.mxu0 %v424
    %584 = vmatprep.mubr.bf16.mxu0 %v165
    %585 = vmatmul.mubr.bf16.gmra.mxu0 %v164
    %v586 = vpop.f32.mrf.mxu0
    %v587 = vadd.f32 %v547, %v586
    %v588 = vpop.f32.mrf.mxu0
    %v589 = vpop.f32.mrf.mxu0
    %v590 = vpop.f32.mrf.mxu0
    %591 = vdwg.mxu0
    %592 = vmatprep.subr.bf16.mxu0 0
    %593 = vmatpush1.bf16.msra.mxu0 %v439
    %594 = vmatprep.subr.bf16.mxu0 0
    %595 = vmatpush1.bf16.msra.mxu0 %v438
    %596 = vmatprep.subr.bf16.mxu0 0
    %597 = vmatpush1.bf16.msra.mxu0 %v437
    %598 = vmatprep.subr.bf16.mxu0 0
    %599 = vmatpush1.bf16.msra.mxu0 %v436
    %600 = vmatprep.subr.bf16.mxu0 0
    %601 = vmatpush1.bf16.msra.mxu0 %v435
    %602 = vmatprep.subr.bf16.mxu0 0
    %603 = vmatpush1.bf16.msra.mxu0 %v434
    %604 = vmatprep.subr.bf16.mxu0 0
    %605 = vmatpush1.bf16.msra.mxu0 %v433
    %606 = vmatprep.subr.bf16.mxu0 0
    %607 = vmatpush1.bf16.msra.mxu0 %v432
    %608 = vmatprep.subr.bf16.mxu0 0
    %609 = vmatpush2.bf16.msra.mxu0 %v447
    %610 = vmatprep.subr.bf16.mxu0 0
    %611 = vmatpush2.bf16.msra.mxu0 %v446
    %612 = vmatprep.subr.bf16.mxu0 0
    %613 = vmatpush2.bf16.msra.mxu0 %v445
    %614 = vmatprep.subr.bf16.mxu0 0
    %615 = vmatpush2.bf16.msra.mxu0 %v444
    %616 = vmatprep.subr.bf16.mxu0 0
    %617 = vmatpush2.bf16.msra.mxu0 %v443
    %618 = vmatprep.subr.bf16.mxu0 0
    %619 = vmatpush2.bf16.msra.mxu0 %v442
    %620 = vmatprep.subr.bf16.mxu0 0
    %621 = vmatpush2.bf16.msra.mxu0 %v441
    %622 = vmatprep.subr.bf16.mxu0 0
    %623 = vmatpush2.bf16.msra.mxu0 %v440
    %624 = vmatprep.mubr.bf16.mxu0 %v167
    %625 = vmatmul.mubr.bf16.gmra.mxu0 %v166
    %v626 = vpop.f32.mrf.mxu0
    %v627 = vadd.f32 %v587, %v626
    %v628 = vpop.f32.mrf.mxu0
    %v629 = vpop.f32.mrf.mxu0
    %v630 = vpop.f32.mrf.mxu0
    %631 = vdwg.mxu0
    %632 = vmatprep.subr.bf16.mxu0 0
    %633 = vmatpush1.bf16.msra.mxu0 %v455
    %634 = vmatprep.subr.bf16.mxu0 0
    %635 = vmatpush1.bf16.msra.mxu0 %v454
    %636 = vmatprep.subr.bf16.mxu0 0
    %637 = vmatpush1.bf16.msra.mxu0 %v453
    %638 = vmatprep.subr.bf16.mxu0 0
    %639 = vmatpush1.bf16.msra.mxu0 %v452
    %640 = vmatprep.subr.bf16.mxu0 0
    %641 = vmatpush1.bf16.msra.mxu0 %v451
    %642 = vmatprep.subr.bf16.mxu0 0
    %643 = vmatpush1.bf16.msra.mxu0 %v450
    %644 = vmatprep.subr.bf16.mxu0 0
    %645 = vmatpush1.bf16.msra.mxu0 %v449
    %646 = vmatprep.subr.bf16.mxu0 0
    %647 = vmatpush1.bf16.msra.mxu0 %v448
    %648 = vmatprep.subr.bf16.mxu0 0
    %649 = vmatpush2.bf16.msra.mxu0 0
    %650 = vmatprep.subr.bf16.mxu0 0
    %651 = vmatpush2.bf16.msra.mxu0 0
    %652 = vmatprep.subr.bf16.mxu0 0
    %653 = vmatpush2.bf16.msra.mxu0 0
    %654 = vmatprep.subr.bf16.mxu0 0
    %655 = vmatpush2.bf16.msra.mxu0 0
    %656 = vmatprep.subr.bf16.mxu0 0
    %657 = vmatpush2.bf16.msra.mxu0 0
    %658 = vmatprep.subr.bf16.mxu0 0
    %659 = vmatpush2.bf16.msra.mxu0 0
    %660 = vmatprep.subr.bf16.mxu0 0
    %661 = vmatpush2.bf16.msra.mxu0 0
    %662 = vmatprep.subr.bf16.mxu0 0
    %663 = vmatpush2.bf16.msra.mxu0 0
    %664 = vmatprep.mubr.bf16.mxu0 0
    %665 = vmatmul.mubr.bf16.gmra.mxu0 %v168
    %v666 = vpop.f32.mrf.mxu0
    %v667 = vadd.f32 %v627, %v666
    %v668 = vpop.f32.mrf.mxu0
    %v669 = vpop.f32.mrf.mxu0
    %v670 = vpop.f32.mrf.mxu0
    %671 = vdwg.mxu0
    %v672 = vmax.f32 %v667, 0.0
    %v673 = vpack.c.bf16 %v672, %v672
    %v674 = vld [vmem:[%s3] sm:$0xf]
    %v675 = vld [vmem:[%s3 + $0x4] sm:$0xf]
    %v676 = vld [vmem:[%s3 + $0x8] sm:$0xf]
    %v677 = vld [vmem:[%s3 + $0xc] sm:$0xf]
    %v678 = vld [vmem:[%s3 + $0x10] sm:$0xf]
    %v679 = vld [vmem:[%s3 + $0x14] sm:$0xf]
    %v680 = vld [vmem:[%s3 + $0x18] sm:$0xf]
    %v681 = vld [vmem:[%s3 + $0x1c] sm:$0xf]
    %v682 = vld [vmem:[%s3 + $0x20] sm:$0xf]
    %v683 = vld [vmem:[%s3 + $0x24] sm:$0xf]
    %v684 = vld [vmem:[%s3 + $0x28] sm:$0xf]
    %v685 = vld [vmem:[%s3 + $0x2c] sm:$0xf]
    %v686 = vld [vmem:[%s3 + $0x30] sm:$0xf]
    %v687 = vld [vmem:[%s3 + $0x34] sm:$0xf]
    %v688 = vld [vmem:[%s3 + $0x38] sm:$0xf]
    %v689 = vld [vmem:[%s3 + $0x3c] sm:$0xf]
    %v690 = vld [vmem:[%s4] sm:$0x1]
    %v692 = vlaneseq
    %v693 = vshrl.u32 %v692, 7
    %v694 = vsub.s32 0, %v693
    %v695 = vrot.slane %v690, %v694
    %v713 = vunpack.c.l.b16 %v674
    %v714 = vunpack.c.l.b16 %v675
    %v715 = vunpack.c.l.b16 %v676
    %v716 = vunpack.c.l.b16 %v677
    %v717 = vunpack.c.l.b16 %v678
    %v718 = vunpack.c.l.b16 %v679
    %v719 = vunpack.c.l.b16 %v680
    %v720 = vunpack.c.l.b16 %v681
    %v721 = vunpack.c.l.b16 %v682
    %v722 = vunpack.c.l.b16 %v683
    %v723 = vunpack.c.l.b16 %v684
    %v724 = vunpack.c.l.b16 %v685
    %v725 = vunpack.c.l.b16 %v686
    %v726 = vunpack.c.l.b16 %v687
    %v727 = vunpack.c.l.b16 %v688
    %v728 = vunpack.c.l.b16 %v689
    %v729 = vpack.c.b16 %v714, %v713
    %v730 = vpack.c.b16 %v716, %v715
    %v731 = vpack.c.b16 %v718, %v717
    %v732 = vpack.c.b16 %v720, %v719
    %v733 = vpack.c.b16 %v722, %v721
    %v734 = vpack.c.b16 %v724, %v723
    %v735 = vpack.c.b16 %v726, %v725
    %v736 = vpack.c.b16 %v728, %v727
    %745 = vmatprep.subr.bf16.mxu0 0
    %746 = vmatpush1.bf16.msra.mxu0 %v736
    %747 = vmatprep.subr.bf16.mxu0 0
    %748 = vmatpush1.bf16.msra.mxu0 %v735
    %749 = vmatprep.subr.bf16.mxu0 0
    %750 = vmatpush1.bf16.msra.mxu0 %v734
    %751 = vmatprep.subr.bf16.mxu0 0
    %752 = vmatpush1.bf16.msra.mxu0 %v733
    %753 = vmatprep.subr.bf16.mxu0 0
    %754 = vmatpush1.bf16.msra.mxu0 %v732
    %755 = vmatprep.subr.bf16.mxu0 0
    %756 = vmatpush1.bf16.msra.mxu0 %v731
    %757 = vmatprep.subr.bf16.mxu0 0
    %758 = vmatpush1.bf16.msra.mxu0 %v730
    %759 = vmatprep.subr.bf16.mxu0 0
    %760 = vmatpush1.bf16.msra.mxu0 %v729
    %761 = vmatprep.subr.bf16.mxu0 0
    %762 = vmatpush2.bf16.msra.mxu0 0
    %763 = vmatprep.subr.bf16.mxu0 0
    %764 = vmatpush2.bf16.msra.mxu0 0
    %765 = vmatprep.subr.bf16.mxu0 0
    %766 = vmatpush2.bf16.msra.mxu0 0
    %767 = vmatprep.subr.bf16.mxu0 0
    %768 = vmatpush2.bf16.msra.mxu0 0
    %769 = vmatprep.subr.bf16.mxu0 0
    %770 = vmatpush2.bf16.msra.mxu0 0
    %771 = vmatprep.subr.bf16.mxu0 0
    %772 = vmatpush2.bf16.msra.mxu0 0
    %773 = vmatprep.subr.bf16.mxu0 0
    %774 = vmatpush2.bf16.msra.mxu0 0
    %775 = vmatprep.subr.bf16.mxu0 0
    %776 = vmatpush2.bf16.msra.mxu0 0
    %777 = vmatprep.mubr.bf16.mxu0 0
    %778 = vmatmul.mubr.bf16.gmra.mxu0 %v673
    %v779 = vpop.f32.mrf.mxu0
    %v780 = vadd.f32 %v695, %v779
    %v781 = vpop.f32.mrf.mxu0
    %v782 = vpop.f32.mrf.mxu0
    %v783 = vpop.f32.mrf.mxu0
    %784 = vdwg.mxu0
    %v785 = vmax.f32 %v780, 0.0
    %v786 = vpack.c.bf16 %v785, %v785
    %s787 = scalar_lea.vmem %s3, 64
    %v788 = vld [vmem:[%s787] sm:$0xf]
    %v789 = vld [vmem:[%s787 + $0x4] sm:$0xf]
    %v790 = vld [vmem:[%s787 + $0x8] sm:$0xf]
    %v791 = vld [vmem:[%s787 + $0xc] sm:$0xf]
    %v792 = vld [vmem:[%s787 + $0x10] sm:$0xf]
    %v793 = vld [vmem:[%s787 + $0x14] sm:$0xf]
    %v794 = vld [vmem:[%s787 + $0x18] sm:$0xf]
    %v795 = vld [vmem:[%s787 + $0x1c] sm:$0xf]
    %v796 = vld [vmem:[%s787 + $0x20] sm:$0xf]
    %v797 = vld [vmem:[%s787 + $0x24] sm:$0xf]
    %v798 = vld [vmem:[%s787 + $0x28] sm:$0xf]
    %v799 = vld [vmem:[%s787 + $0x2c] sm:$0xf]
    %v800 = vld [vmem:[%s787 + $0x30] sm:$0xf]
    %v801 = vld [vmem:[%s787 + $0x34] sm:$0xf]
    %v802 = vld [vmem:[%s787 + $0x38] sm:$0xf]
    %v803 = vld [vmem:[%s787 + $0x3c] sm:$0xf]
    %s804 = scalar_lea.vmem %s4, 1
    %v805 = vld [vmem:[%s804] sm:$0x1]
    %v807 = vlaneseq
    %v808 = vshrl.u32 %v807, 7
    %v809 = vsub.s32 0, %v808
    %v810 = vrot.slane %v805, %v809
    %v828 = vunpack.c.l.b16 %v788
    %v829 = vunpack.c.l.b16 %v789
    %v830 = vunpack.c.l.b16 %v790
    %v831 = vunpack.c.l.b16 %v791
    %v832 = vunpack.c.l.b16 %v792
    %v833 = vunpack.c.l.b16 %v793
    %v834 = vunpack.c.l.b16 %v794
    %v835 = vunpack.c.l.b16 %v795
    %v836 = vunpack.c.l.b16 %v796
    %v837 = vunpack.c.l.b16 %v797
    %v838 = vunpack.c.l.b16 %v798
    %v839 = vunpack.c.l.b16 %v799
    %v840 = vunpack.c.l.b16 %v800
    %v841 = vunpack.c.l.b16 %v801
    %v842 = vunpack.c.l.b16 %v802
    %v843 = vunpack.c.l.b16 %v803
    %v844 = vpack.c.b16 %v829, %v828
    %v845 = vpack.c.b16 %v831, %v830
    %v846 = vpack.c.b16 %v833, %v832
    %v847 = vpack.c.b16 %v835, %v834
    %v848 = vpack.c.b16 %v837, %v836
    %v849 = vpack.c.b16 %v839, %v838
    %v850 = vpack.c.b16 %v841, %v840
    %v851 = vpack.c.b16 %v843, %v842
    %860 = vmatprep.subr.bf16.mxu0 0
    %861 = vmatpush1.bf16.msra.mxu0 %v851
    %862 = vmatprep.subr.bf16.mxu0 0
    %863 = vmatpush1.bf16.msra.mxu0 %v850
    %864 = vmatprep.subr.bf16.mxu0 0
    %865 = vmatpush1.bf16.msra.mxu0 %v849
    %866 = vmatprep.subr.bf16.mxu0 0
    %867 = vmatpush1.bf16.msra.mxu0 %v848
    %868 = vmatprep.subr.bf16.mxu0 0
    %869 = vmatpush1.bf16.msra.mxu0 %v847
    %870 = vmatprep.subr.bf16.mxu0 0
    %871 = vmatpush1.bf16.msra.mxu0 %v846
    %872 = vmatprep.subr.bf16.mxu0 0
    %873 = vmatpush1.bf16.msra.mxu0 %v845
    %874 = vmatprep.subr.bf16.mxu0 0
    %875 = vmatpush1.bf16.msra.mxu0 %v844
    %876 = vmatprep.subr.bf16.mxu0 0
    %877 = vmatpush2.bf16.msra.mxu0 0
    %878 = vmatprep.subr.bf16.mxu0 0
    %879 = vmatpush2.bf16.msra.mxu0 0
    %880 = vmatprep.subr.bf16.mxu0 0
    %881 = vmatpush2.bf16.msra.mxu0 0
    %882 = vmatprep.subr.bf16.mxu0 0
    %883 = vmatpush2.bf16.msra.mxu0 0
    %884 = vmatprep.subr.bf16.mxu0 0
    %885 = vmatpush2.bf16.msra.mxu0 0
    %886 = vmatprep.subr.bf16.mxu0 0
    %887 = vmatpush2.bf16.msra.mxu0 0
    %888 = vmatprep.subr.bf16.mxu0 0
    %889 = vmatpush2.bf16.msra.mxu0 0
    %890 = vmatprep.subr.bf16.mxu0 0
    %891 = vmatpush2.bf16.msra.mxu0 0
    %892 = vmatprep.mubr.bf16.mxu0 0
    %893 = vmatmul.mubr.bf16.gmra.mxu0 %v786
    %v894 = vpop.f32.mrf.mxu0
    %v895 = vadd.f32 %v810, %v894
    %v896 = vpop.f32.mrf.mxu0
    %v897 = vpop.f32.mrf.mxu0
    %v898 = vpop.f32.mrf.mxu0
    %899 = vdwg.mxu0
    %v900 = vmax.f32 %v895, 0.0
    %v901 = vpack.c.bf16 %v900, %v900
    %v902 = vld [vmem:[%s5] sm:$0xf]
    %v903 = vld [vmem:[%s5 + $0x4] sm:$0xf]
    %v904 = vld [vmem:[%s5 + $0x8] sm:$0xf]
    %v905 = vld [vmem:[%s5 + $0xc] sm:$0xf]
    %v906 = vld [vmem:[%s5 + $0x10] sm:$0xf]
    %v907 = vld [vmem:[%s5 + $0x14] sm:$0xf]
    %v908 = vld [vmem:[%s5 + $0x18] sm:$0xf]
    %v909 = vld [vmem:[%s5 + $0x1c] sm:$0xf]
    %v910 = vld [vmem:[%s5 + $0x20] sm:$0xf]
    %v911 = vld [vmem:[%s5 + $0x24] sm:$0xf]
    %v912 = vld [vmem:[%s5 + $0x28] sm:$0xf]
    %v913 = vld [vmem:[%s5 + $0x2c] sm:$0xf]
    %v914 = vld [vmem:[%s5 + $0x30] sm:$0xf]
    %v915 = vld [vmem:[%s5 + $0x34] sm:$0xf]
    %v916 = vld [vmem:[%s5 + $0x38] sm:$0xf]
    %v917 = vld [vmem:[%s5 + $0x3c] sm:$0xf]
    %v918 = vld [vmem:[%s6] sm:$0x1]
    %v920 = vlaneseq
    %v921 = vshrl.u32 %v920, 7
    %v922 = vsub.s32 0, %v921
    %v923 = vrot.slane %v918, %v922
    %v941 = vunpack.c.l.b16 %v902
    %v942 = vunpack.c.l.b16 %v903
    %v943 = vunpack.c.l.b16 %v904
    %v944 = vunpack.c.l.b16 %v905
    %v945 = vunpack.c.l.b16 %v906
    %v946 = vunpack.c.l.b16 %v907
    %v947 = vunpack.c.l.b16 %v908
    %v948 = vunpack.c.l.b16 %v909
    %v949 = vunpack.c.l.b16 %v910
    %v950 = vunpack.c.l.b16 %v911
    %v951 = vunpack.c.l.b16 %v912
    %v952 = vunpack.c.l.b16 %v913
    %v953 = vunpack.c.l.b16 %v914
    %v954 = vunpack.c.l.b16 %v915
    %v955 = vunpack.c.l.b16 %v916
    %v956 = vunpack.c.l.b16 %v917
    %v957 = vpack.c.b16 %v942, %v941
    %v958 = vpack.c.b16 %v944, %v943
    %v959 = vpack.c.b16 %v946, %v945
    %v960 = vpack.c.b16 %v948, %v947
    %v961 = vpack.c.b16 %v950, %v949
    %v962 = vpack.c.b16 %v952, %v951
    %v963 = vpack.c.b16 %v954, %v953
    %v964 = vpack.c.b16 %v956, %v955
    %973 = vmatprep.subr.bf16.mxu0 0
    %974 = vmatpush1.bf16.msra.mxu0 %v964
    %975 = vmatprep.subr.bf16.mxu0 0
    %976 = vmatpush1.bf16.msra.mxu0 %v963
    %977 = vmatprep.subr.bf16.mxu0 0
    %978 = vmatpush1.bf16.msra.mxu0 %v962
    %979 = vmatprep.subr.bf16.mxu0 0
    %980 = vmatpush1.bf16.msra.mxu0 %v961
    %981 = vmatprep.subr.bf16.mxu0 0
    %982 = vmatpush1.bf16.msra.mxu0 %v960
    %983 = vmatprep.subr.bf16.mxu0 0
    %984 = vmatpush1.bf16.msra.mxu0 %v959
    %985 = vmatprep.subr.bf16.mxu0 0
    %986 = vmatpush1.bf16.msra.mxu0 %v958
    %987 = vmatprep.subr.bf16.mxu0 0
    %988 = vmatpush1.bf16.msra.mxu0 %v957
    %989 = vmatprep.subr.bf16.mxu0 0
    %990 = vmatpush2.bf16.msra.mxu0 0
    %991 = vmatprep.subr.bf16.mxu0 0
    %992 = vmatpush2.bf16.msra.mxu0 0
    %993 = vmatprep.subr.bf16.mxu0 0
    %994 = vmatpush2.bf16.msra.mxu0 0
    %995 = vmatprep.subr.bf16.mxu0 0
    %996 = vmatpush2.bf16.msra.mxu0 0
    %997 = vmatprep.subr.bf16.mxu0 0
    %998 = vmatpush2.bf16.msra.mxu0 0
    %999 = vmatprep.subr.bf16.mxu0 0
    %1000 = vmatpush2.bf16.msra.mxu0 0
    %1001 = vmatprep.subr.bf16.mxu0 0
    %1002 = vmatpush2.bf16.msra.mxu0 0
    %1003 = vmatprep.subr.bf16.mxu0 0
    %1004 = vmatpush2.bf16.msra.mxu0 0
    %1005 = vmatprep.mubr.bf16.mxu0 0
    %1006 = vmatmul.mubr.bf16.gmra.mxu0 %v901
    %v1007 = vpop.f32.mrf.mxu0
    %v1008 = vadd.f32 %v923, %v1007
    %v1009 = vpop.f32.mrf.mxu0
    %v1010 = vpop.f32.mrf.mxu0
    %v1011 = vpop.f32.mrf.mxu0
    %1012 = vdwg.mxu0
    %1013 = vst [vmem:[#allocation2] sm:$0xff] %v1008
    // Predicated region
    $region30: #{neural_network_forward.1} parent=1 // pred_check
      _
    $region31: #{neural_network_forward.1} parent=1 // pred_check_branch
      %1015 = sbr.rel (0) target = $region33
    $region32: #{neural_network_forward.1} parent=1 // pred_region
      %s1017 = ssub.s32 128, 128
      %1018 = vsyncadd [#allocation3], %s1017
      %s1020 = sshll.u32 [#allocation2], 4
      %s1021 = int_to_ptr.vmem [resolvable:$true] %s1020
      %1023 = dma.vmem_to_hbm [thread:$0]  %s1021, 128, %s7, [#allocation3]
    $region33: #{neural_network_forward.1} parent=1 // pred_fallthru
      _
    // Predicated region
    $region34: #{neural_network_forward.1} parent=1 // pred_check
      _
    $region35: #{neural_network_forward.1} parent=1 // pred_check_branch
      %1025 = sbr.rel (0) target = $region37
    $region36: #{neural_network_forward.1} parent=1 // pred_region
      %1026 = dma.done [#allocation3], 128
    $region37: #{neural_network_forward.1} parent=1 // pred_fallthru
      _
    %1027 = vsyncpa [#allocation3], 1

</llo_original>
